<compile_context>
chip_gen: v6e
topology: v6e:2x2x1
jax: 0.10.0
libtpu: 0.0.40
codegen_flags: <defaults>
</compile_context>

<pallas_src>
import jax
import jax.numpy as jnp
from jax.experimental import pallas as pl
from jax.experimental.pallas import tpu as pltpu


def _h_swish_kernel(x_ref, o_ref):
    x = x_ref[...]
    # h_sigmoid(x) = relu6(x + 3) / 6 ; h_swish(x) = x * h_sigmoid(x)
    # (python-float constants are weakly typed, so bf16 inputs stay bf16)
    hs = jnp.clip(x + 3.0, 0.0, 6.0) * (1.0 / 6.0)
    o_ref[...] = (x * hs).astype(o_ref.dtype)


def _sublane_multiple(dtype) -> int:
    # (8,128) tile for 32-bit, (16,128) for 16-bit, (32,128) for 8-bit.
    itemsize = jnp.dtype(dtype).itemsize
    return max(8, 32 // itemsize)


def _choose_lane(total: int):
    # Widest lane-dense last dim that divides the element count exactly
    # (no pad / no tail slice). Returns None for ragged totals.
    for w in (8192, 4096, 2048, 1024, 512, 256, 128):
        if total % w == 0:
            return w
    return None


def h_swish(x, *, target_tile_bytes: int = 2 << 20):
    """Elementwise hard-swish. x: any shape, float dtype. Same shape/dtype out."""
    orig_shape = x.shape
    dtype = x.dtype
    total = x.size
    itemsize = jnp.dtype(dtype).itemsize
    sub = _sublane_multiple(dtype)

    lane = _choose_lane(total)
    if lane is None:
        # Ragged total: pad only up to one lane multiple, slice the tail off
        # afterwards (two cheap extra passes, only on the fallback path).
        lane = 128
        rows = pl.cdiv(total, lane)
        padded_total = rows * lane
        x2d = jnp.pad(x.reshape(-1), (0, padded_total - total)).reshape(rows, lane)
        ragged = True
    else:
        # Fast path: pure reshape, zero extra HBM passes.
        rows = total // lane
        x2d = x.reshape(rows, lane)
        ragged = False

    # ---- tile sizing -------------------------------------------------------
    row_bytes = lane * itemsize
    min_split_tile_bytes = 128 << 10  # only force a 2-way split above this

    if rows <= sub:
        # Tiny input: single block covering the whole (rows, lane) slab.
        tile_rows = rows
    else:
        # ~target_tile_bytes per buffer, rounded down to the sublane multiple.
        tile_rows = max(sub, (target_tile_bytes // row_bytes) // sub * sub)
        # Never bigger than the (sublane-rounded) row count.
        tile_rows = min(tile_rows, pl.cdiv(rows, sub) * sub)
        # Prefer >= 2 grid steps so v7x can shard the parallel axis over its
        # 2 TCs -- but only when the resulting tiles stay large enough to keep
        # DMA bursts long and amortize the per-step overhead.
        half_rows = pl.cdiv(pl.cdiv(rows, 2), sub) * sub
        if half_rows * row_bytes >= min_split_tile_bytes:
            tile_rows = min(tile_rows, max(sub, half_rows))

    grid = (pl.cdiv(rows, tile_rows),)

    cost = pl.CostEstimate(
        flops=5 * total,
        transcendentals=0,
        bytes_accessed=2 * total * itemsize,
    )

    out2d = pl.pallas_call(
        _h_swish_kernel,
        out_shape=jax.ShapeDtypeStruct((rows, lane), dtype),
        grid_spec=pltpu.PrefetchScalarGridSpec(
            num_scalar_prefetch=0,
            grid=grid,
            in_specs=[pl.BlockSpec((tile_rows, lane), lambda i: (i, 0))],
            out_specs=pl.BlockSpec((tile_rows, lane), lambda i: (i, 0)),
        ),
        compiler_params=pltpu.CompilerParams(
            dimension_semantics=("parallel",),
        ),
        cost_estimate=cost,
    )(x2d)

    if ragged:
        return out2d.reshape(-1)[:total].reshape(orig_shape)
    return out2d.reshape(orig_shape)


def h_swish_ref(x):
    return x * (jnp.clip(x + 3.0, 0.0, 6.0) / 6.0)


if __name__ == "__main__":
    key = jax.random.PRNGKey(0)

    # NCHW input like the PyTorch module: batch=2, channels=4, spatial=16x16.
    x = jax.random.normal(key, (2, 4, 16, 16), dtype=jnp.float32) * 4.0
    out = jax.block_until_ready(h_swish(x))
    ref = h_swish_ref(x)
    assert out.shape == x.shape and out.dtype == x.dtype
    assert jnp.allclose(out, ref, atol=1e-6, rtol=1e-6)

    # Ragged-size path (total % 128 != 0) exercises the pad/slice fallback.
    x2 = jax.random.normal(jax.random.PRNGKey(1), (3, 5, 7), dtype=jnp.float32) * 4.0
    out2 = jax.block_until_ready(h_swish(x2))
    ref2 = h_swish_ref(x2)
    assert out2.shape == x2.shape and out2.dtype == x2.dtype
    assert jnp.allclose(out2, ref2, atol=1e-6, rtol=1e-6)

    # bf16 path exercises the 16-sublane tiling branch.
    x3 = (jax.random.normal(jax.random.PRNGKey(2), (2, 8, 32, 32)) * 4.0).astype(jnp.bfloat16)
    out3 = jax.block_until_ready(h_swish(x3))
    ref3 = h_swish_ref(x3.astype(jnp.float32)).astype(jnp.bfloat16)
    assert out3.shape == x3.shape and out3.dtype == x3.dtype
    assert jnp.allclose(out3.astype(jnp.float32), ref3.astype(jnp.float32), atol=2e-2, rtol=2e-2)

    print("KERNEL_OK")
</pallas_src>

<mosaic_0001>
module attributes {stable_mosaic.version = 11 : i64} {
  func.func @_h_swish_kernel(%arg0: i32, %arg1: memref<1x2048xf32, #tpu.memory_space<vmem>>, %arg2: memref<1x2048xf32, #tpu.memory_space<vmem>>) attributes {dimension_semantics = [#tpu.dimension_semantics<parallel>], iteration_bounds = array<i64: 1>, scalar_prefetch = 0 : i64, scratch_operands = 0 : i64, tpu.core_type = #tpu.core_type<tc>, window_params = [{transform_indices = @transform_0, window_bounds = array<i64: 1, 2048>}, {transform_indices = @transform_1, window_bounds = array<i64: 1, 2048>}]} {
    %c0 = arith.constant 0 : index
    %c0_0 = arith.constant 0 : index
    %0 = vector.load %arg1[%c0, %c0_0] : memref<1x2048xf32, #tpu.memory_space<vmem>>, vector<1x2048xf32>
    %cst = arith.constant 3.000000e+00 : f32
    %1 = vector.broadcast %cst : f32 to vector<1x2048xf32>
    %2 = arith.addf %0, %1 : vector<1x2048xf32>
    %cst_1 = arith.constant 0.000000e+00 : f32
    %cst_2 = arith.constant 6.000000e+00 : f32
    %3 = vector.broadcast %cst_1 : f32 to vector<1x2048xf32>
    %4 = arith.maximumf %3, %2 : vector<1x2048xf32>
    %5 = vector.broadcast %cst_2 : f32 to vector<1x2048xf32>
    %6 = arith.minimumf %5, %4 : vector<1x2048xf32>
    %cst_3 = arith.constant 0.166666672 : f32
    %7 = vector.broadcast %cst_3 : f32 to vector<1x2048xf32>
    %8 = arith.mulf %6, %7 : vector<1x2048xf32>
    %9 = arith.mulf %0, %8 : vector<1x2048xf32>
    %c0_4 = arith.constant 0 : index
    %c0_5 = arith.constant 0 : index
    %10 = vector.load %arg2[%c0_4, %c0_5] : memref<1x2048xf32, #tpu.memory_space<vmem>>, vector<1x2048xf32>
    tpu.vector_store %arg2[%c0_4, %c0_5], %9 {strides = array<i32>} : memref<1x2048xf32, #tpu.memory_space<vmem>>, vector<1x2048xf32>,
    return
  }
  func.func @transform_0(%arg0: i32) -> (i32, i32) {
    %c0_i32 = arith.constant 0 : i32
    %c0_i32_0 = arith.constant 0 : i32
    return %arg0, %c0_i32 : i32, i32
  }
  func.func @transform_1(%arg0: i32) -> (i32, i32) {
    %c0_i32 = arith.constant 0 : i32
    %c0_i32_0 = arith.constant 0 : i32
    return %arg0, %c0_i32 : i32, i32
  }
}

</mosaic_0001>

<llo_original>
// kernel: tpu_custom_call.1
$region0: #{tpu_custom_call.1}
  #allocation0 [shape = 'u32[]', space=smem, size = 0x4, offset = 0x4, fixed_abs, tag = 'smem constant byte address 0x4 - core index']
  #allocation1 [shape = 'u32[144,128]{1,0:T(1,128)}', space=vmem, size = 0x12000, scoped, tag = 'internal scratch']
  %s0 = inlined_call_operand.hbm [shape: f32[1,2048], index: 0, kind: input, shape index: {}]
  %s1 = inlined_call_operand.hbm [shape: f32[1,2048], index: 1, kind: output, shape index: {}]
  %s2 = sld [smem:[#allocation0]]
  $region18: #{tpu_custom_call.1} parent=0
    _
  %s4 = ssub.s32 1, %s2
  %s5 = scalar_select 0, %s4, %s2
  $region1: #{tpu_custom_call.1} parent=0
    #allocation2 [shape = 'u8[8192]{0}', space=vmem, size = 0x2000, scoped, tag = 'input window, operand 0, single buffered']
    #allocation3 [shape = 's32[1]{0}', space=sflag, size = 0x4, scoped, tag = 'scoped memory for tpu_custom_call.1']
    #allocation4 [shape = 's32[1]{0}', space=sflag, size = 0x4, scoped, tag = 'scoped memory for tpu_custom_call.1']
    #allocation5 [shape = 'u8[8192]{0}', space=vmem, size = 0x2000, scoped, tag = 'output window, operand 0, single buffered']
    %6 = vsyncpa [#allocation3], 0
    %7 = vsyncpa [#allocation4], 0
    // Predicated region
    $region2: #{tpu_custom_call.1} parent=1 // pred_check
      _
    $region3: #{tpu_custom_call.1} parent=1 // pred_check_branch
      %9 = sbr.rel (0) target = $region5
    $region4: #{tpu_custom_call.1} parent=1 // pred_region
      %s11 = ssub.s32 256, 256
      %12 = vsyncadd [#allocation3], %s11
      %s14 = sshll.u32 [#allocation2], 4
      %s15 = int_to_ptr.vmem [resolvable:$true] %s14
      %17 = dma.hbm_to_vmem [thread:$0]  %s0, 256, %s15, [#allocation3]
    $region5: #{tpu_custom_call.1} parent=1 // pred_fallthru
      _
    // Predicated region
    $region6: #{tpu_custom_call.1} parent=1 // pred_check
      _
    $region7: #{tpu_custom_call.1} parent=1 // pred_check_branch
      %19 = sbr.rel (0) target = $region9
    $region8: #{tpu_custom_call.1} parent=1 // pred_region
      %20 = dma.done [#allocation3], 256
    $region9: #{tpu_custom_call.1} parent=1 // pred_fallthru
      _
    %v21 = vld [vmem:[#allocation2] sm:$0xff]
    %v22 = vld [vmem:[#allocation2 + $0x8] sm:$0xff]
    %v23 = vadd.f32 %v21, 3.0
    %v24 = vadd.f32 %v22, 3.0
    %v25 = vmax.f32 %v23, 0.0
    %v26 = vmax.f32 %v24, 0.0
    %v27 = vmin.f32 %v25, 6.0
    %v28 = vmin.f32 %v26, 6.0
    %v29 = vmul.f32 %v27, 0.16666667
    %v30 = vmul.f32 %v28, 0.16666667
    %v31 = vmul.f32 %v21, %v29
    %v32 = vmul.f32 %v22, %v30
    %33 = vst [vmem:[#allocation5] sm:$0xff] %v31
    %34 = vst [vmem:[#allocation5 + $0x8] sm:$0xff] %v32
    // Predicated region
    $region10: #{tpu_custom_call.1} parent=1 // pred_check
      _
    $region11: #{tpu_custom_call.1} parent=1 // pred_check_branch
      %36 = sbr.rel (0) target = $region13
    $region12: #{tpu_custom_call.1} parent=1 // pred_region
      %s38 = ssub.s32 256, 256
      %39 = vsyncadd [#allocation4], %s38
      %s41 = sshll.u32 [#allocation5], 4
      %s42 = int_to_ptr.vmem [resolvable:$true] %s41
      %44 = dma.vmem_to_hbm [thread:$0]  %s42, 256, %s1, [#allocation4]
    $region13: #{tpu_custom_call.1} parent=1 // pred_fallthru
      _
    // Predicated region
    $region14: #{tpu_custom_call.1} parent=1 // pred_check
      _
    $region15: #{tpu_custom_call.1} parent=1 // pred_check_branch
      %46 = sbr.rel (0) target = $region17
    $region16: #{tpu_custom_call.1} parent=1 // pred_region
      %47 = dma.done [#allocation4], 256
    $region17: #{tpu_custom_call.1} parent=1 // pred_fallthru
      _
    %48 = vsyncpa [#allocation3], 1
    %49 = vsyncpa [#allocation4], 1

</llo_original>
